<compile_context>
chip_gen: v7x
topology: tpu7x:2x2x1
jax: 0.10.0
libtpu: 0.0.40
codegen_flags: <defaults>
</compile_context>

<pallas_src>
import functools

import jax
import jax.numpy as jnp
from jax.experimental import pallas as pl
from jax.experimental.pallas import tpu as pltpu


def _layernorm_kernel(x_ref, g_ref, b_ref, o_ref, *, eps, inv_c, approx_recip):
    # x_ref: (n_b, C, T) tile; g_ref/b_ref: (1, C, 1) constant f32 blocks.
    x = x_ref[...].astype(jnp.float32)
    mean = jnp.sum(x, axis=1, keepdims=True) * inv_c                 # (n_b, 1, T)
    # Two-pass population variance (unbiased=False); (x - mean) is recomputed
    # in the fused normalize pass rather than kept live as a CxT f32 buffer.
    var = jnp.sum((x - mean) * (x - mean), axis=1, keepdims=True) * inv_c
    std = jnp.sqrt(var)
    inv = pl.reciprocal(std + eps, approx=approx_recip)              # (n_b, 1, T)
    o_ref[...] = ((x - mean) * inv * g_ref[...] + b_ref[...]).astype(o_ref.dtype)


def _choose_tiling(N, C, HW_pad, itemsize, vmem_budget):
    """Pick (n_b, t_hw): batch block and lane tile.

    VMEM accounting per lane column per batch element:
      double-buffered input  : 2 * itemsize * C
      double-buffered output : 2 * itemsize * C
      f32 upcast temporaries : ~2 * 4 * C
    """
    col_bytes = max(1, C * (4 * itemsize + 8))
    max_cols = max(128, (vmem_budget // col_bytes) // 128 * 128)

    # Largest multiple of 128 dividing HW_pad that fits the budget.
    t_hw = min(HW_pad, max_cols)
    t_hw -= t_hw % 128
    t_hw = max(t_hw, 128)
    while t_hw > 128 and HW_pad % t_hw != 0:
        t_hw -= 128
    if HW_pad % t_hw != 0:  # HW_pad is always a multiple of 128
        t_hw = 128
    n_hw = HW_pad // t_hw

    # Batch blocking: grow n_b while the per-step DMA (in+out) is small,
    # there are still >= 2 total grid steps, and VMEM allows it.
    target_io = 2 << 20  # ~2 MiB of real in+out data per grid step

    def io_bytes(nb):
        return 2 * nb * C * t_hw * itemsize

    def vmem_bytes(nb):
        return nb * C * t_hw * (4 * itemsize + 8)

    n_b = 1
    for cand in range(2, N + 1):
        if N % cand != 0:
            continue
        if io_bytes(n_b) >= target_io:
            break
        if (N // cand) * n_hw < 2:
            break
        if vmem_bytes(cand) > vmem_budget:
            break
        n_b = cand
    return n_b, t_hw


def layer_norm_nchw(x, g, b, eps=1e-5):
    """x: (N, C, H, W); g, b: (1, C, 1, 1).  Returns (N, C, H, W)."""
    N, C, H, W = x.shape
    HW = H * W
    HW_pad = ((HW + 127) // 128) * 128

    x2 = x.reshape(N, C, HW)
    if HW_pad != HW:
        # Lane-dense padding: each lane column normalizes independently over
        # C, so zero columns stay finite (output = b) and are sliced off.
        x2 = jnp.pad(x2, ((0, 0), (0, 0), (0, HW_pad - HW)))

    # Hoist the affine-param cast out of the kernel.
    g2 = g.reshape(1, C, 1).astype(jnp.float32)
    b2 = b.reshape(1, C, 1).astype(jnp.float32)

    # Per-chip VMEM capacity (v7x: 64 MiB per TC; v5e/v6e: 128 MiB).
    try:
        vmem_cap = int(getattr(pltpu.get_tpu_info(), "vmem_capacity_bytes",
                               64 << 20))
    except Exception:  # interpret mode / CPU tracing fallback
        vmem_cap = 64 << 20
    itemsize = jnp.dtype(x.dtype).itemsize

    # Budget ~45% of physical VMEM for this kernel's blocks + temporaries.
    vmem_budget = max(8 << 20, int(vmem_cap * 0.45))
    n_b, t_hw = _choose_tiling(N, C, HW_pad, itemsize, vmem_budget)
    n_hw = HW_pad // t_hw

    # Scoped-VMEM limit sized to the actual per-step need (with headroom),
    # floored at 32 MiB (v5e scoped default is 16 MiB), capped under physical.
    step_vmem = n_b * C * t_hw * (4 * itemsize + 8) + 4 * C * 8
    vmem_limit = int(min(max(int(1.5 * step_vmem), 32 << 20),
                         int(vmem_cap * 0.8)))

    approx_recip = (jnp.dtype(x.dtype) == jnp.bfloat16)

    out = pl.pallas_call(
        functools.partial(_layernorm_kernel, eps=eps, inv_c=1.0 / C,
                          approx_recip=approx_recip),
        out_shape=jax.ShapeDtypeStruct((N, C, HW_pad), x.dtype),
        grid=(N // n_b, n_hw),
        in_specs=[
            pl.BlockSpec((n_b, C, t_hw), lambda i, j: (i, 0, j)),
            pl.BlockSpec((1, C, 1), lambda i, j: (0, 0, 0)),
            pl.BlockSpec((1, C, 1), lambda i, j: (0, 0, 0)),
        ],
        out_specs=pl.BlockSpec((n_b, C, t_hw), lambda i, j: (i, 0, j)),
        compiler_params=pltpu.CompilerParams(
            dimension_semantics=("parallel", "parallel"),
            vmem_limit_bytes=vmem_limit,
        ),
    )(x2, g2, b2)

    if HW_pad != HW:
        out = out[:, :, :HW]
    return out.reshape(N, C, H, W)


def _reference(x, g, b, eps=1e-5):
    xf = x.astype(jnp.float32)
    mean = jnp.mean(xf, axis=1, keepdims=True)
    var = jnp.var(xf, axis=1, keepdims=True)          # ddof=0 == unbiased=False
    std = jnp.sqrt(var)
    return ((xf - mean) / (std + eps) * g + b).astype(x.dtype)


def _check(key, N, C, H, W, dtype=jnp.float32):
    kx, kg, kb = jax.random.split(key, 3)
    x = jax.random.normal(kx, (N, C, H, W), dtype=jnp.float32).astype(dtype)
    # Params per nn.Module __init__: g = ones(1,C,1,1), b = zeros(1,C,1,1);
    # perturb deterministically so the affine path is exercised.
    g = jnp.ones((1, C, 1, 1), jnp.float32) + 0.1 * jax.random.normal(kg, (1, C, 1, 1))
    b = jnp.zeros((1, C, 1, 1), jnp.float32) + 0.1 * jax.random.normal(kb, (1, C, 1, 1))

    out = jax.block_until_ready(layer_norm_nchw(x, g, b, eps=1e-5))
    ref = _reference(x, g, b, eps=1e-5)
    assert out.shape == (N, C, H, W)
    tol = 1e-5 if dtype == jnp.float32 else 2e-2
    assert jnp.allclose(out.astype(jnp.float32), ref.astype(jnp.float32),
                        atol=tol, rtol=tol), \
        f"mismatch vs reference for shape {(N, C, H, W)} dtype {dtype}"


if __name__ == "__main__":
    key = jax.random.PRNGKey(0)
    k1, k2, k3, k4 = jax.random.split(key, 4)

    # Small NCHW shape consistent with the module's channel-norm usage.
    _check(k1, N=2, C=4, H=16, W=16)
    # SSFTransformer attention operates on 5x5 patches (HW=25): exercises the
    # lane-padding path (HW not a multiple of 128).
    _check(k2, N=2, C=32, H=5, W=5)
    # ResNet-like feature map (HW=49): another padding case.
    _check(k3, N=2, C=8, H=7, W=7)
    # Multi-tile HW path (HW a large multiple of 128).
    _check(k4, N=2, C=8, H=64, W=64)

    print("KERNEL_OK")
</pallas_src>

<mosaic_0001>
module attributes {stable_mosaic.version = 11 : i64} {
  func.func @_layernorm_kernel(%arg0: i32, %arg1: i32, %arg2: memref<1x4x256xf32, #tpu.memory_space<vmem>>, %arg3: memref<1x4x1xf32, #tpu.memory_space<vmem>>, %arg4: memref<1x4x1xf32, #tpu.memory_space<vmem>>, %arg5: memref<1x4x256xf32, #tpu.memory_space<vmem>>) attributes {dimension_semantics = [#tpu.dimension_semantics<parallel>, #tpu.dimension_semantics<parallel>], iteration_bounds = array<i64: 2, 1>, scalar_prefetch = 0 : i64, scratch_operands = 0 : i64, tpu.core_type = #tpu.core_type<tc>, window_params = [{transform_indices = @transform_0, window_bounds = array<i64: 1, 4, 256>}, {pipeline_mode = #tpu.pipeline_mode<synchronous>, transform_indices = @transform_1, window_bounds = array<i64: 1, 4, 1>}, {pipeline_mode = #tpu.pipeline_mode<synchronous>, transform_indices = @transform_2, window_bounds = array<i64: 1, 4, 1>}, {transform_indices = @transform_3, window_bounds = array<i64: 1, 4, 256>}]} {
    %c0 = arith.constant 0 : index
    %c0_0 = arith.constant 0 : index
    %c0_1 = arith.constant 0 : index
    %0 = vector.load %arg2[%c0, %c0_0, %c0_1] : memref<1x4x256xf32, #tpu.memory_space<vmem>>, vector<1x4x256xf32>
    %cst = arith.constant dense<0.000000e+00> : vector<1x256xf32>
    %1 = vector.multi_reduction <add>, %0, %cst [1] : vector<1x4x256xf32> to vector<1x256xf32>
    %2 = vector.shape_cast %1 : vector<1x256xf32> to vector<1x1x256xf32>
    %cst_2 = arith.constant 2.500000e-01 : f32
    %3 = vector.broadcast %cst_2 : f32 to vector<1x1x256xf32>
    %4 = arith.mulf %2, %3 : vector<1x1x256xf32>
    %5 = vector.broadcast %4 : vector<1x1x256xf32> to vector<1x4x256xf32>
    %6 = arith.subf %0, %5 : vector<1x4x256xf32>
    %7 = vector.broadcast %4 : vector<1x1x256xf32> to vector<1x4x256xf32>
    %8 = arith.subf %0, %7 : vector<1x4x256xf32>
    %9 = arith.mulf %6, %8 : vector<1x4x256xf32>
    %cst_3 = arith.constant dense<0.000000e+00> : vector<1x256xf32>
    %10 = vector.multi_reduction <add>, %9, %cst_3 [1] : vector<1x4x256xf32> to vector<1x256xf32>
    %11 = vector.shape_cast %10 : vector<1x256xf32> to vector<1x1x256xf32>
    %cst_4 = arith.constant 2.500000e-01 : f32
    %12 = vector.broadcast %cst_4 : f32 to vector<1x1x256xf32>
    %13 = arith.mulf %11, %12 : vector<1x1x256xf32>
    %14 = math.sqrt %13 : vector<1x1x256xf32>
    %cst_5 = arith.constant 9.99999974E-6 : f32
    %15 = vector.broadcast %cst_5 : f32 to vector<1x1x256xf32>
    %16 = arith.addf %14, %15 : vector<1x1x256xf32>
    %17 = tpu.reciprocal %16 : vector<1x1x256xf32> -> vector<1x1x256xf32>
    %18 = vector.broadcast %4 : vector<1x1x256xf32> to vector<1x4x256xf32>
    %19 = arith.subf %0, %18 : vector<1x4x256xf32>
    %20 = vector.broadcast %17 : vector<1x1x256xf32> to vector<1x4x256xf32>
    %21 = arith.mulf %19, %20 : vector<1x4x256xf32>
    %c0_6 = arith.constant 0 : index
    %c0_7 = arith.constant 0 : index
    %c0_8 = arith.constant 0 : index
    %22 = vector.load %arg3[%c0_6, %c0_7, %c0_8] : memref<1x4x1xf32, #tpu.memory_space<vmem>>, vector<1x4x1xf32>
    %23 = vector.broadcast %22 : vector<1x4x1xf32> to vector<1x4x256xf32>
    %24 = arith.mulf %21, %23 : vector<1x4x256xf32>
    %c0_9 = arith.constant 0 : index
    %c0_10 = arith.constant 0 : index
    %c0_11 = arith.constant 0 : index
    %25 = vector.load %arg4[%c0_9, %c0_10, %c0_11] : memref<1x4x1xf32, #tpu.memory_space<vmem>>, vector<1x4x1xf32>
    %26 = vector.broadcast %25 : vector<1x4x1xf32> to vector<1x4x256xf32>
    %27 = arith.addf %24, %26 : vector<1x4x256xf32>
    %c0_12 = arith.constant 0 : index
    %c0_13 = arith.constant 0 : index
    %c0_14 = arith.constant 0 : index
    %28 = vector.load %arg5[%c0_12, %c0_13, %c0_14] : memref<1x4x256xf32, #tpu.memory_space<vmem>>, vector<1x4x256xf32>
    tpu.vector_store %arg5[%c0_12, %c0_13, %c0_14], %27 {strides = array<i32>} : memref<1x4x256xf32, #tpu.memory_space<vmem>>, vector<1x4x256xf32>,
    return
  }
  func.func @transform_0(%arg0: i32, %arg1: i32) -> (i32, i32, i32) {
    %c0_i32 = arith.constant 0 : i32
    %c0_i32_0 = arith.constant 0 : i32
    return %arg0, %c0_i32, %arg1 : i32, i32, i32
  }
  func.func @transform_1(%arg0: i32, %arg1: i32) -> (i32, i32, i32) {
    %c0_i32 = arith.constant 0 : i32
    %c0_i32_0 = arith.constant 0 : i32
    %c0_i32_1 = arith.constant 0 : i32
    %c0_i32_2 = arith.constant 0 : i32
    return %c0_i32, %c0_i32_0, %c0_i32_1 : i32, i32, i32
  }
  func.func @transform_2(%arg0: i32, %arg1: i32) -> (i32, i32, i32) {
    %c0_i32 = arith.constant 0 : i32
    %c0_i32_0 = arith.constant 0 : i32
    %c0_i32_1 = arith.constant 0 : i32
    %c0_i32_2 = arith.constant 0 : i32
    return %c0_i32, %c0_i32_0, %c0_i32_1 : i32, i32, i32
  }
  func.func @transform_3(%arg0: i32, %arg1: i32) -> (i32, i32, i32) {
    %c0_i32 = arith.constant 0 : i32
    %c0_i32_0 = arith.constant 0 : i32
    return %arg0, %c0_i32, %arg1 : i32, i32, i32
  }
}

</mosaic_0001>

<llo_original>
// kernel: tpu_custom_call.1
$region0: #{tpu_custom_call.1}
  #allocation0 [shape = 'u32[]', space=smem, size = 0x4, offset = 0x4, fixed_abs, tag = 'smem constant byte address 0x4 - core index']
  #allocation1 [shape = 'u32[144,128]{1,0:T(1,128)}', space=vmem, size = 0x12000, scoped, tag = 'internal scratch']
  %s0 = inlined_call_operand.hbm [shape: f32[2,4,256], index: 0, kind: input, shape index: {}]
  %s1 = inlined_call_operand.vmem [shape: f32[1,4,1], index: 1, kind: input, shape index: {}]
  %s2 = inlined_call_operand.vmem [shape: f32[1,4,1], index: 2, kind: input, shape index: {}]
  %s3 = inlined_call_operand.hbm [shape: f32[2,4,256], index: 3, kind: output, shape index: {}]
  %s4 = sld [smem:[#allocation0]]
  $region49: #{tpu_custom_call.1} parent=0
    _
  %s6 = ssub.s32 1, %s4
  %s7 = scalar_select 0, %s6, %s4
  $region1: #{tpu_custom_call.1} parent=0
    #allocation2 [shape = 'u8[8192]{0}', space=vmem, size = 0x2000, scoped, tag = 'input window, operand 0']
    #allocation3 [shape = 's32[2]{0}', space=sflag, size = 0x8, scoped, tag = 'scoped memory for tpu_custom_call.1']
    #allocation4 [shape = 's32[2]{0}', space=sflag, size = 0x8, scoped, tag = 'scoped memory for tpu_custom_call.1']
    #allocation5 [shape = 'u8[8192]{0}', space=vmem, size = 0x2000, scoped, tag = 'output window, operand 0']
    %8 = vsyncpa [#allocation3], 0
    %s9 = scalar_lea.sflag [#allocation3], 1
    %10 = vsyncpa %s9, 0
    %11 = vsyncpa [#allocation4], 0
    %s12 = scalar_lea.sflag [#allocation4], 1
    %13 = vsyncpa %s12, 0
    loop: start=0, step=1, limit=4
    $region2: #{tpu_custom_call.1} parent=1 // loop_pre_header
      _
    $region3: #{tpu_custom_call.1} parent=1 // loop_header
      %s15 = sphi 0, %s19
      %p16 = scmp.ge.s32.totalorder %s15, 4
      %s22 = sphi 0, %s34
      %s23 = sphi 0, %s30
      %s24 = sphi 0, %s22
      %s25 = sphi 0, %s23
      %s26 = sphi 0, %s24
      %s27 = sphi 0, %s25
      %s39 = sphi 0, %s41
      %s42 = sphi 0, %s39
      %s43 = sphi 0, %s42
      %s59 = sphi 0, %s43
      %s63 = sphi 0, %s63
      %s65 = sphi 0, %s63
      %s66 = sphi 0, %s65
      %s80 = sphi 0, %s66
      %s84 = sphi 0, %s84
      %s86 = sphi 0, %s84
      %s87 = sphi 0, %s86
      %s101 = sphi 0, %s87
      %s109 = sphi 0, %s111
      %s112 = sphi 0, %s109
      %s113 = sphi 0, %s112
      %s129 = sphi 0, %s113
    $region4: #{tpu_custom_call.1} parent=1 // loop_header_branch
      %18 = sbr.rel (%p16) target = $region8
    $region5: #{tpu_custom_call.1} parent=1 // loop_body
      %s20 = ssub.s32 %s15, 1
      %s21 = ssub.s32 %s15, 2
      %s28 = sadd.s32 1, %s23
      %p29 = scmp.ge.s32.totalorder %s28, 1
      %s30 = scalar_select %p29, 0, %s28
      %s31 = sadd.s32 1, %s22
      %s32 = scalar_select %p29, %s31, %s22
      %p33 = scmp.ge.s32.totalorder %s32, 2
      %s34 = scalar_select %p33, 0, %s32
      %s35 = ssub.s32 %s22, %s34
      %s36 = ssub.s32 %s23, %s30
      %s37 = sor.u32 %s35, %s36
      %p38 = scmp.eq.s32.totalorder %s37, 0
      %s40 = sadd.s32 %s39, 1
      %s41 = scalar_select %p38, %s39, %s40
      %p44 = pneg %p38
      %p45 = scmp.eq.s32.totalorder %s15, 1
      %p46 = por %p44, %p45
      %p47 = scmp.ne.s32.totalorder %s39, %s42
      %p48 = scmp.eq.s32.totalorder %s15, 0
      %p49 = por %p47, %p48
      %p50 = scmp.ne.s32.totalorder %s39, %s42
      %p51 = scmp.eq.s32.totalorder %s20, 1
      %p52 = por %p50, %p51
      %p53 = scmp.ne.s32.totalorder %s42, %s43
      %p54 = scmp.eq.s32.totalorder %s20, 0
      %p55 = por %p53, %p54
      %p56 = scmp.ne.s32.totalorder %s42, %s43
      %p57 = scmp.eq.s32.totalorder %s21, 1
      %p58 = por %p56, %p57
      %p60 = scmp.ne.s32.totalorder %s43, %s59
      %p61 = scmp.eq.s32.totalorder %s21, 0
      %p62 = por %p60, %p61
      %s64 = sadd.s32 %s63, 1
      %p67 = scmp.eq.s32.totalorder %s15, 1
      %p68 = scmp.ne.s32.totalorder %s63, %s65
      %p69 = scmp.eq.s32.totalorder %s15, 0
      %p70 = por %p68, %p69
      %p71 = scmp.ne.s32.totalorder %s63, %s65
      %p72 = scmp.eq.s32.totalorder %s20, 1
      %p73 = por %p71, %p72
      %p74 = scmp.ne.s32.totalorder %s65, %s66
      %p75 = scmp.eq.s32.totalorder %s20, 0
      %p76 = por %p74, %p75
      %p77 = scmp.ne.s32.totalorder %s65, %s66
      %p78 = scmp.eq.s32.totalorder %s21, 1
      %p79 = por %p77, %p78
      %p81 = scmp.ne.s32.totalorder %s66, %s80
      %p82 = scmp.eq.s32.totalorder %s21, 0
      %p83 = por %p81, %p82
      %s85 = sadd.s32 %s84, 1
      %p88 = scmp.eq.s32.totalorder %s15, 1
      %p89 = scmp.ne.s32.totalorder %s84, %s86
      %p90 = scmp.eq.s32.totalorder %s15, 0
      %p91 = por %p89, %p90
      %p92 = scmp.ne.s32.totalorder %s84, %s86
      %p93 = scmp.eq.s32.totalorder %s20, 1
      %p94 = por %p92, %p93
      %p95 = scmp.ne.s32.totalorder %s86, %s87
      %p96 = scmp.eq.s32.totalorder %s20, 0
      %p97 = por %p95, %p96
      %p98 = scmp.ne.s32.totalorder %s86, %s87
      %p99 = scmp.eq.s32.totalorder %s21, 1
      %p100 = por %p98, %p99
      %p102 = scmp.ne.s32.totalorder %s87, %s101
      %p103 = scmp.eq.s32.totalorder %s21, 0
      %p104 = por %p102, %p103
      %s105 = ssub.s32 %s22, %s34
      %s106 = ssub.s32 %s23, %s30
      %s107 = sor.u32 %s105, %s106
      %p108 = scmp.eq.s32.totalorder %s107, 0
      %s110 = sadd.s32 %s109, 1
      %s111 = scalar_select %p108, %s109, %s110
      %p114 = pneg %p108
      %p115 = scmp.eq.s32.totalorder %s15, 1
      %p116 = por %p114, %p115
      %p117 = scmp.ne.s32.totalorder %s109, %s112
      %p118 = scmp.eq.s32.totalorder %s15, 0
      %p119 = por %p117, %p118
      %p120 = scmp.ne.s32.totalorder %s109, %s112
      %p121 = scmp.eq.s32.totalorder %s20, 1
      %p122 = por %p120, %p121
      %p123 = scmp.ne.s32.totalorder %s112, %s113
      %p124 = scmp.eq.s32.totalorder %s20, 0
      %p125 = por %p123, %p124
      %p126 = scmp.ne.s32.totalorder %s112, %s113
      %p127 = scmp.eq.s32.totalorder %s21, 1
      %p128 = por %p126, %p127
      %p130 = scmp.ne.s32.totalorder %s113, %s129
      %p131 = scmp.eq.s32.totalorder %s21, 0
      %p132 = por %p130, %p131
      %p133 = scmp.le.s32.totalorder 1, %s15
      %p134 = scmp.lt.s32.totalorder %s15, 3
      %p135 = pnand %p133, %p134
      %p136 = pneg %p135
      // Predicated region
      $region9: #{tpu_custom_call.1} parent=5 // pred_check
        _
      $region10: #{tpu_custom_call.1} parent=5 // pred_check_branch
        %138 = sbr.rel (%p135) target = $region12
      $region11: #{tpu_custom_call.1} parent=5 // pred_region
        %s139 = ssub.s32 %s15, 1
        // Predicated region
        $region13: #{tpu_custom_call.1} parent=11 // pred_check
          %p140 = pneg %p76
        $region14: #{tpu_custom_call.1} parent=11 // pred_check_branch
          %142 = sbr.rel (%p140) target = $region16
        $region15: #{tpu_custom_call.1} parent=11 // pred_region
          _
        $region16: #{tpu_custom_call.1} parent=11 // pred_fallthru
          _
        // Predicated region
        $region17: #{tpu_custom_call.1} parent=11 // pred_check
          %p143 = pneg %p97
        $region18: #{tpu_custom_call.1} parent=11 // pred_check_branch
          %145 = sbr.rel (%p143) target = $region20
        $region19: #{tpu_custom_call.1} parent=11 // pred_region
          _
        $region20: #{tpu_custom_call.1} parent=11 // pred_fallthru
          _
      $region12: #{tpu_custom_call.1} parent=5 // pred_fallthru
        _
      %p146 = scmp.lt.s32.totalorder %s15, 2
      // Predicated region
      $region21: #{tpu_custom_call.1} parent=5 // pred_check
        %p147 = pneg %p146
      $region22: #{tpu_custom_call.1} parent=5 // pred_check_branch
        %149 = sbr.rel (%p147) target = $region24
      $region23: #{tpu_custom_call.1} parent=5 // pred_region
        // Predicated region
        $region25: #{tpu_custom_call.1} parent=23 // pred_check
          %p150 = pneg %p49
        $region26: #{tpu_custom_call.1} parent=23 // pred_check_branch
          %152 = sbr.rel (%p150) target = $region28
        $region27: #{tpu_custom_call.1} parent=23 // pred_region
          %s153 = sand.u32 %s39, 1
          %s154 = scalar_lea.sflag [#allocation3], %s153
          %s155 = sand.u32 %s39, 1
          %s156 = smul.addr %s155, 8
          %s157 = scalar_lea.vmem [#allocation2], %s156
          %s158 = smul.u32 2, %s23
          %s160 = ssub.s32 128, 128
          %161 = vsyncadd %s154, %s160
          %s162 = smul.addr %s22, 2
          %s163 = sadd.s32 %s158, %s162
          %s164 = smul.addr %s163, 64
          %s165 = scalar_lea.hbm %s0, %s164
          %s167 = sshll.u32 %s157, 4
          %s168 = int_to_ptr.vmem [resolvable:$true] %s167
          %170 = dma.hbm_to_vmem [thread:$0]  %s165, 128, %s168, %s154
        $region28: #{tpu_custom_call.1} parent=23 // pred_fallthru
          _
      $region24: #{tpu_custom_call.1} parent=5 // pred_fallthru
        _
      %p171 = scmp.le.s32.totalorder 1, %s15
      %p172 = scmp.lt.s32.totalorder %s15, 3
      %p173 = pnand %p171, %p172
      %p174 = pneg %p173
      // Predicated region
      $region29: #{tpu_custom_call.1} parent=5 // pred_check
        _
      $region30: #{tpu_custom_call.1} parent=5 // pred_check_branch
        %176 = sbr.rel (%p173) target = $region32
      $region31: #{tpu_custom_call.1} parent=5 // pred_region
        %s177 = ssub.s32 %s15, 1
        %s178 = sand.u32 %s42, 1
        %s179 = scalar_lea.sflag [#allocation3], %s178
        %s180 = sand.u32 %s42, 1
        %s181 = smul.addr %s180, 8
        %s182 = scalar_lea.vmem [#allocation2], %s181
        // Predicated region
        $region33: #{tpu_custom_call.1} parent=31 // pred_check
          %p183 = pneg %p55
        $region34: #{tpu_custom_call.1} parent=31 // pred_check_branch
          %185 = sbr.rel (%p183) target = $region36
        $region35: #{tpu_custom_call.1} parent=31 // pred_region
          %186 = dma.done %s179, 128
        $region36: #{tpu_custom_call.1} parent=31 // pred_fallthru
          _
        %s187 = sand.u32 %s42, 1
        %s188 = scalar_lea.sflag [#allocation3], %s187
        %s189 = sand.u32 %s42, 1
        %s190 = smul.addr %s189, 8
        %s191 = scalar_lea.vmem [#allocation2], %s190
        %p192 = pneg %p55
        %p193 = pneg %p52
        %p194 = pneg %p76
        %p195 = pneg %p73
        %p196 = pneg %p97
        %p197 = pneg %p94
        %p198 = pneg %p125
        %p199 = pneg %p122
        %s200 = sand.u32 %s112, 1
        %s201 = scalar_lea.sflag [#allocation4], %s200
        %s202 = sand.u32 %s112, 1
        %s203 = smul.addr %s202, 8
        %s204 = scalar_lea.vmem [#allocation5], %s203
        %s205 = smul.u32 2, %s25
        %s206 = smul.u32 2, %s25
        %v207 = vld [vmem:[%s182] sm:$0xff]
        %v209 = vcombine.high %v207, %v207
        %vm211 = vcmask 1043456
        %v212 = vsel %vm211, %v207, 0.0
        %v213 = vrot.slane %v212, 4
        %v214 = vadd.f32 %v212, %v213
        %v215 = vrot.slane %v214, 2
        %v216 = vadd.f32 %v214, %v215
        %v217 = vrot.slane %v216, 1
        %v218 = vadd.f32 %v216, %v217
        %v219 = vsel %vm211, %v209, 0.0
        %v220 = vrot.slane %v219, 4
        %v221 = vadd.f32 %v219, %v220
        %v222 = vrot.slane %v221, 2
        %v223 = vadd.f32 %v221, %v222
        %v224 = vrot.slane %v223, 1
        %v225 = vadd.f32 %v223, %v224
        %v226 = vmul.f32 %v218, 0.25
        %v227 = vmul.f32 %v225, 0.25
        %v230 = vcombine.low %v226, %v227
        %v232 = vsub.f32 %v207, %v230
        %v233 = vmul.f32 %v232, %v232
        %v235 = vcombine.high %v233, %v233
        %v237 = vsel %vm211, %v233, 0.0
        %v238 = vrot.slane %v237, 4
        %v239 = vadd.f32 %v237, %v238
        %v240 = vrot.slane %v239, 2
        %v241 = vadd.f32 %v239, %v240
        %v242 = vrot.slane %v241, 1
        %v243 = vadd.f32 %v241, %v242
        %v244 = vsel %vm211, %v235, 0.0
        %v245 = vrot.slane %v244, 4
        %v246 = vadd.f32 %v244, %v245
        %v247 = vrot.slane %v246, 2
        %v248 = vadd.f32 %v246, %v247
        %v249 = vrot.slane %v248, 1
        %v250 = vadd.f32 %v248, %v249
        %v251 = vmul.f32 %v243, 0.25
        %v252 = vmul.f32 %v250, 0.25
        %v253 = vrsqrt.pop %v251
        %v254 = vmul.f32 %v251, %v253
        %vm255 = vcmp.eq.f32.partialorder %v251, inf
        %v256 = vsel %vm255, %v251, %v254
        %vm257 = vcmp.eq.f32.partialorder %v251, 0.0
        %v258 = vand.u32 %v251, 2147483648
        %v259 = vsel %vm257, %v258, %v256
        %v260 = vrsqrt.pop %v252
        %v261 = vmul.f32 %v252, %v260
        %vm262 = vcmp.eq.f32.partialorder %v252, inf
        %v263 = vsel %vm262, %v252, %v261
        %vm264 = vcmp.eq.f32.partialorder %v252, 0.0
        %v265 = vand.u32 %v252, 2147483648
        %v266 = vsel %vm264, %v265, %v263
        %v267 = vadd.f32 %v259, 1e-05
        %v268 = vadd.f32 %v266, 1e-05
        %v269 = vrcp.pop %v267
        %v270 = vrcp.pop %v268
        %v273 = vcombine.low %v269, %v270
        %v275 = vmul.f32 %v232, %v273
        %v276 = vld [vmem:[%s1] sm:$0xf]
        %278 = vset.pattern.permute.xlu0 0
        %279 = vperm.xlu0 %278, %v276
        %v280 = vpop.permute.xlu0 %279
        %v282 = vunpack.c.l.s4 839922192
        %v283 = vunpack.c.0.s8 %v282
        %v284 = vlaneseq
        %v285 = vshrl.u32 %v284, 7
        %v286 = vsub.s32 %v283, %v285
        %v287 = vrot.slane %v280, %v286
        %v289 = vmul.f32 %v275, %v287
        %v290 = vld [vmem:[%s2] sm:$0xf]
        %292 = vset.pattern.permute.xlu0 0
        %293 = vperm.xlu0 %292, %v290
        %v294 = vpop.permute.xlu0 %293
        %v296 = vunpack.c.l.s4 839922192
        %v297 = vunpack.c.0.s8 %v296
        %v298 = vlaneseq
        %v299 = vshrl.u32 %v298, 7
        %v300 = vsub.s32 %v297, %v299
        %v301 = vrot.slane %v294, %v300
        %v303 = vadd.f32 %v289, %v301
        %304 = vst [vmem:[%s204] sm:$0xff] %v303
        %s305 = sand.u32 %s112, 1
        %s306 = scalar_lea.sflag [#allocation4], %s305
        %s307 = sand.u32 %s112, 1
        %s308 = smul.addr %s307, 8
        %s309 = scalar_lea.vmem [#allocation5], %s308
        // Predicated region
        $region37: #{tpu_custom_call.1} parent=31 // pred_check
          %p310 = pneg %p122
        $region38: #{tpu_custom_call.1} parent=31 // pred_check_branch
          %312 = sbr.rel (%p310) target = $region40
        $region39: #{tpu_custom_call.1} parent=31 // pred_region
          %s313 = smul.u32 2, %s25
          %s315 = ssub.s32 128, 128
          %316 = vsyncadd %s306, %s315
          %s317 = smul.addr %s24, 2
          %s318 = sadd.s32 %s313, %s317
          %s319 = smul.addr %s318, 64
          %s320 = scalar_lea.hbm %s3, %s319
          %s322 = sshll.u32 %s309, 4
          %s323 = int_to_ptr.vmem [resolvable:$true] %s322
          %325 = dma.vmem_to_hbm [thread:$0]  %s323, 128, %s320, %s306
        $region40: #{tpu_custom_call.1} parent=31 // pred_fallthru
          _
      $region32: #{tpu_custom_call.1} parent=5 // pred_fallthru
        _
      %p326 = scmp.le.s32.totalorder 2, %s15
      // Predicated region
      $region41: #{tpu_custom_call.1} parent=5 // pred_check
        %p327 = pneg %p326
      $region42: #{tpu_custom_call.1} parent=5 // pred_check_branch
        %329 = sbr.rel (%p327) target = $region44
      $region43: #{tpu_custom_call.1} parent=5 // pred_region
        %s330 = ssub.s32 %s15, 2
        // Predicated region
        $region45: #{tpu_custom_call.1} parent=43 // pred_check
          %p331 = pneg %p128
        $region46: #{tpu_custom_call.1} parent=43 // pred_check_branch
          %333 = sbr.rel (%p331) target = $region48
        $region47: #{tpu_custom_call.1} parent=43 // pred_region
          %s334 = sand.u32 %s113, 1
          %s335 = scalar_lea.sflag [#allocation4], %s334
          %s336 = sand.u32 %s113, 1
          %s337 = smul.addr %s336, 8
          %s338 = scalar_lea.vmem [#allocation5], %s337
          %339 = dma.done %s335, 128
        $region48: #{tpu_custom_call.1} parent=43 // pred_fallthru
          _
      $region44: #{tpu_custom_call.1} parent=5 // pred_fallthru
        _
    $region6: #{tpu_custom_call.1} parent=1 // loop_footer
      %s19 = sadd.s32 1, %s15
    $region7: #{tpu_custom_call.1} parent=1 // loop_footer_branch
      %14 = sbr.rel target = $region3
    $region8: #{tpu_custom_call.1} parent=1 // loop_exit
      _
    %340 = vsyncpa [#allocation3], 1
    %s341 = scalar_lea.sflag [#allocation3], 1
    %342 = vsyncpa %s341, 1
    %343 = vsyncpa [#allocation4], 1
    %s344 = scalar_lea.sflag [#allocation4], 1
    %345 = vsyncpa %s344, 1

</llo_original>
